<compile_context>
chip_gen: v7x
topology: tpu7x:2x2x1
jax: 0.10.0
libtpu: 0.0.40
codegen_flags: <defaults>
</compile_context>

<pallas_src>
import jax
import jax.numpy as jnp
from jax.experimental import pallas as pl
from jax.experimental.pallas import tpu as pltpu


def bcn_kernel(x_ref, w1_ref, b1_ref, w2_ref, b2_ref, w3_ref, b3_ref,
               logp_ref, logits_ref):
    x = x_ref[...]

    # Layer 1: Linear + ReLU   (MXU matmul, f32 accumulate, 128-wide lanes)
    h1 = jnp.dot(x, w1_ref[...], preferred_element_type=jnp.float32) + b1_ref[...]
    h1 = jnp.maximum(h1, 0.0)

    # Layer 2: Linear + ReLU
    h2 = jnp.dot(h1, w2_ref[...], preferred_element_type=jnp.float32) + b2_ref[...]
    h2 = jnp.maximum(h2, 0.0)

    # Layer 3: Linear (logits).  Lane-pad columns carry bias = -1e30 so they
    # contribute exp(-1e30 - m) == 0 to the softmax denominator and never win max.
    logits = jnp.dot(h2, w3_ref[...], preferred_element_type=jnp.float32) + b3_ref[...]

    # log_softmax over the action (last) axis, computed on the padded 128-lane slab.
    m = jnp.max(logits, axis=-1, keepdims=True)
    shifted = logits - m
    lse = jnp.log(jnp.sum(jnp.exp(shifted), axis=-1, keepdims=True))

    # Store only the real action columns (narrow HBM writes; pad sentinels dropped).
    na = logits_ref.shape[-1]
    logits_ref[...] = logits[:, :na].astype(logits_ref.dtype)
    logp_ref[...] = (shifted[:, :na] - lse).astype(logp_ref.dtype)


def _round_up(x, m):
    return ((x + m - 1) // m) * m


def bcn_pack_params(w1, b1, w2, b2, w3, b3):
    """Pad weights/biases to 128-lane widths ONCE (hoisted out of the forward path).

    Weights are expected pre-transposed to [in, out]; biases are [out].
    """
    state_dim = w1.shape[0]
    layer_size = w1.shape[1]
    num_actions = w3.shape[1]

    H = _round_up(max(layer_size, 128), 128)
    A = _round_up(max(num_actions, 128), 128)

    f32 = jnp.float32
    w1p = jnp.zeros((state_dim, H), f32).at[:, :layer_size].set(w1.astype(f32))
    b1p = jnp.zeros((1, H), f32).at[:, :layer_size].set(b1.reshape(1, -1).astype(f32))
    w2p = jnp.zeros((H, H), f32).at[:layer_size, :layer_size].set(w2.astype(f32))
    b2p = jnp.zeros((1, H), f32).at[:, :layer_size].set(b2.reshape(1, -1).astype(f32))
    w3p = jnp.zeros((H, A), f32).at[:layer_size, :num_actions].set(w3.astype(f32))
    # Pad logits columns get a huge negative bias so max / logsumexp ignore them.
    b3p = jnp.full((1, A), -1e30, f32).at[:, :num_actions].set(
        b3.reshape(1, -1).astype(f32))

    meta = dict(state_dim=state_dim, layer_size=layer_size,
                num_actions=num_actions, H=H, A=A)
    return (w1p, b1p, w2p, b2p, w3p, b3p), meta


def bcn_forward(state, packed_params, meta, *, tile_b=2048):
    """state: [B, state_dim]; packed_params/meta from bcn_pack_params."""
    w1p, b1p, w2p, b2p, w3p, b3p = packed_params
    B, state_dim = state.shape
    assert state_dim == meta["state_dim"]
    H, A = meta["H"], meta["A"]
    num_actions = meta["num_actions"]

    f32 = jnp.float32

    # --- batch tiling (pad B up to a multiple of the tile) ---
    tile_b = int(min(tile_b, _round_up(B, 8)))
    tile_b = _round_up(tile_b, 8)

    # Keep the double-buffered working set comfortably under the smallest scoped-VMEM
    # default (v5e: 16 MiB) without having to override vmem_limit_bytes.
    def vmem_est(tb):
        io = 2 * tb * state_dim * 4 + 2 * 2 * tb * num_actions * 4      # dbuf in/out
        weights = 2 * 4 * (state_dim * H + H * H + H * A + 2 * H + A)   # dbuf weights
        scratch = 3 * tb * max(H, A) * 4                                # h1/h2/logits
        return io + weights + scratch
    while tile_b > 256 and vmem_est(tile_b) > 10 * (1 << 20):
        tile_b //= 2
        tile_b = _round_up(tile_b, 8)

    Bp = _round_up(B, tile_b)
    state_p = state.astype(f32)
    if Bp != B:
        state_p = jnp.pad(state_p, ((0, Bp - B), (0, 0)))
    grid = (Bp // tile_b,)

    cost = pl.CostEstimate(
        flops=2 * Bp * (state_dim * H + H * H + H * A),
        transcendentals=Bp * (A + 1),
        bytes_accessed=4 * (Bp * state_dim + state_dim * H + H * H + H * A
                            + 2 * H + A + 2 * Bp * num_actions),
    )

    def const_spec(shape):
        return pl.BlockSpec(shape, lambda i: (0, 0))

    logp_p, logits_p = pl.pallas_call(
        bcn_kernel,
        grid=grid,
        in_specs=[
            pl.BlockSpec((tile_b, state_dim), lambda i: (i, 0)),  # state (pipelined)
            const_spec((state_dim, H)),                           # w1 (resident)
            const_spec((1, H)),                                   # b1
            const_spec((H, H)),                                   # w2
            const_spec((1, H)),                                   # b2
            const_spec((H, A)),                                   # w3
            const_spec((1, A)),                                   # b3
        ],
        out_specs=(
            pl.BlockSpec((tile_b, num_actions), lambda i: (i, 0)),  # log-probs
            pl.BlockSpec((tile_b, num_actions), lambda i: (i, 0)),  # logits
        ),
        out_shape=(
            jax.ShapeDtypeStruct((Bp, num_actions), jnp.float32),
            jax.ShapeDtypeStruct((Bp, num_actions), jnp.float32),
        ),
        compiler_params=pltpu.CompilerParams(
            dimension_semantics=("parallel",),
        ),
        cost_estimate=cost,
    )(state_p, w1p, b1p, w2p, b2p, w3p, b3p)

    # Only padded batch rows (if any) need slicing; lane widths are already exact.
    if Bp != B:
        return logp_p[:B], logits_p[:B]
    return logp_p, logits_p


def reference_forward(state, w1, b1, w2, b2, w3, b3):
    h1 = jnp.maximum(state @ w1 + b1, 0.0)
    h2 = jnp.maximum(h1 @ w2 + b2, 0.0)
    logits = h2 @ w3 + b3
    return jax.nn.log_softmax(logits, axis=1), logits


if __name__ == "__main__":
    # BCN(state_dim, num_actions, layer_size) at small shapes.
    batch = 8
    state_dim = 32
    layer_size = 64
    num_actions = 16

    key = jax.random.PRNGKey(0)
    ks = jax.random.split(key, 7)

    def lin_init(kw, kb, fan_in, fan_out):
        bound = 1.0 / jnp.sqrt(fan_in)
        w = jax.random.uniform(kw, (fan_in, fan_out), jnp.float32, -bound, bound)
        b = jax.random.uniform(kb, (fan_out,), jnp.float32, -bound, bound)
        return w, b

    w1, b1 = lin_init(ks[0], ks[1], state_dim, layer_size)
    w2, b2 = lin_init(ks[2], ks[3], layer_size, layer_size)
    w3, b3 = lin_init(ks[4], ks[5], layer_size, num_actions)

    state = jax.random.normal(ks[6], (batch, state_dim), jnp.float32)

    # Pack / pad parameters once (hoisted out of the per-call forward path).
    packed, meta = bcn_pack_params(w1, b1, w2, b2, w3, b3)
    packed = jax.tree_util.tree_map(jax.block_until_ready, packed)

    logp, logits = jax.block_until_ready(bcn_forward(state, packed, meta))

    ref_logp, ref_logits = reference_forward(state, w1, b1, w2, b2, w3, b3)
    assert logits.shape == (batch, num_actions)
    assert logp.shape == (batch, num_actions)
    assert jnp.allclose(logits, ref_logits, atol=1e-5, rtol=1e-5)
    assert jnp.allclose(logp, ref_logp, atol=1e-5, rtol=1e-5)

    print("KERNEL_OK")
</pallas_src>

<mosaic_0001>
module attributes {stable_mosaic.version = 11 : i64} {
  func.func @bcn_kernel(%arg0: i32, %arg1: memref<8x32xf32, #tpu.memory_space<vmem>>, %arg2: memref<32x128xf32, #tpu.memory_space<vmem>>, %arg3: memref<1x128xf32, #tpu.memory_space<vmem>>, %arg4: memref<128x128xf32, #tpu.memory_space<vmem>>, %arg5: memref<1x128xf32, #tpu.memory_space<vmem>>, %arg6: memref<128x128xf32, #tpu.memory_space<vmem>>, %arg7: memref<1x128xf32, #tpu.memory_space<vmem>>, %arg8: memref<8x16xf32, #tpu.memory_space<vmem>>, %arg9: memref<8x16xf32, #tpu.memory_space<vmem>>) attributes {dimension_semantics = [#tpu.dimension_semantics<parallel>], iteration_bounds = array<i64: 1>, scalar_prefetch = 0 : i64, scratch_operands = 0 : i64, tpu.core_type = #tpu.core_type<tc>, window_params = [{transform_indices = @transform_0, window_bounds = array<i64: 8, 32>}, {pipeline_mode = #tpu.pipeline_mode<synchronous>, transform_indices = @transform_1, window_bounds = array<i64: 32, 128>}, {pipeline_mode = #tpu.pipeline_mode<synchronous>, transform_indices = @transform_2, window_bounds = array<i64: 1, 128>}, {pipeline_mode = #tpu.pipeline_mode<synchronous>, transform_indices = @transform_3, window_bounds = array<i64: 128, 128>}, {pipeline_mode = #tpu.pipeline_mode<synchronous>, transform_indices = @transform_4, window_bounds = array<i64: 1, 128>}, {pipeline_mode = #tpu.pipeline_mode<synchronous>, transform_indices = @transform_5, window_bounds = array<i64: 128, 128>}, {pipeline_mode = #tpu.pipeline_mode<synchronous>, transform_indices = @transform_6, window_bounds = array<i64: 1, 128>}, {transform_indices = @transform_7, window_bounds = array<i64: 8, 16>}, {transform_indices = @transform_8, window_bounds = array<i64: 8, 16>}]} {
    %c0 = arith.constant 0 : index
    %c0_0 = arith.constant 0 : index
    %0 = vector.load %arg1[%c0, %c0_0] : memref<8x32xf32, #tpu.memory_space<vmem>>, vector<8x32xf32>
    %c0_1 = arith.constant 0 : index
    %c0_2 = arith.constant 0 : index
    %1 = vector.load %arg2[%c0_1, %c0_2] : memref<32x128xf32, #tpu.memory_space<vmem>>, vector<32x128xf32>
    %cst = arith.constant dense<0.000000e+00> : vector<8x128xf32>
    %2 = tpu.matmul %0, %1, %cst {dimension_numbers = #tpu.dot_dimension_numbers<[1], [0], [0], [1], [0, 0, 1, 1], [], []>} : vector<8x32xf32>, vector<32x128xf32>, vector<8x128xf32> -> vector<8x128xf32>
    %c0_3 = arith.constant 0 : index
    %c0_4 = arith.constant 0 : index
    %3 = vector.load %arg3[%c0_3, %c0_4] : memref<1x128xf32, #tpu.memory_space<vmem>>, vector<1x128xf32>
    %4 = vector.broadcast %3 : vector<1x128xf32> to vector<8x128xf32>
    %5 = arith.addf %2, %4 : vector<8x128xf32>
    %cst_5 = arith.constant 0.000000e+00 : f32
    %6 = vector.broadcast %cst_5 : f32 to vector<8x128xf32>
    %7 = arith.maximumf %5, %6 : vector<8x128xf32>
    %c0_6 = arith.constant 0 : index
    %c0_7 = arith.constant 0 : index
    %8 = vector.load %arg4[%c0_6, %c0_7] : memref<128x128xf32, #tpu.memory_space<vmem>>, vector<128x128xf32>
    %cst_8 = arith.constant dense<0.000000e+00> : vector<8x128xf32>
    %9 = tpu.matmul %7, %8, %cst_8 {dimension_numbers = #tpu.dot_dimension_numbers<[1], [0], [0], [1], [0, 0, 1, 1], [], []>} : vector<8x128xf32>, vector<128x128xf32>, vector<8x128xf32> -> vector<8x128xf32>
    %c0_9 = arith.constant 0 : index
    %c0_10 = arith.constant 0 : index
    %10 = vector.load %arg5[%c0_9, %c0_10] : memref<1x128xf32, #tpu.memory_space<vmem>>, vector<1x128xf32>
    %11 = vector.broadcast %10 : vector<1x128xf32> to vector<8x128xf32>
    %12 = arith.addf %9, %11 : vector<8x128xf32>
    %cst_11 = arith.constant 0.000000e+00 : f32
    %13 = vector.broadcast %cst_11 : f32 to vector<8x128xf32>
    %14 = arith.maximumf %12, %13 : vector<8x128xf32>
    %c0_12 = arith.constant 0 : index
    %c0_13 = arith.constant 0 : index
    %15 = vector.load %arg6[%c0_12, %c0_13] : memref<128x128xf32, #tpu.memory_space<vmem>>, vector<128x128xf32>
    %cst_14 = arith.constant dense<0.000000e+00> : vector<8x128xf32>
    %16 = tpu.matmul %14, %15, %cst_14 {dimension_numbers = #tpu.dot_dimension_numbers<[1], [0], [0], [1], [0, 0, 1, 1], [], []>} : vector<8x128xf32>, vector<128x128xf32>, vector<8x128xf32> -> vector<8x128xf32>
    %c0_15 = arith.constant 0 : index
    %c0_16 = arith.constant 0 : index
    %17 = vector.load %arg7[%c0_15, %c0_16] : memref<1x128xf32, #tpu.memory_space<vmem>>, vector<1x128xf32>
    %18 = vector.broadcast %17 : vector<1x128xf32> to vector<8x128xf32>
    %19 = arith.addf %16, %18 : vector<8x128xf32>
    %cst_17 = arith.constant dense<0xFF800000> : vector<8xf32>
    %20 = vector.multi_reduction <maximumf>, %19, %cst_17 [1] : vector<8x128xf32> to vector<8xf32>
    %21 = vector.shape_cast %20 : vector<8xf32> to vector<8x1xf32>
    %22 = vector.broadcast %21 : vector<8x1xf32> to vector<8x128xf32>
    %23 = arith.subf %19, %22 : vector<8x128xf32>
    %24 = math.exp %23 : vector<8x128xf32>
    %cst_18 = arith.constant dense<0.000000e+00> : vector<8xf32>
    %25 = vector.multi_reduction <add>, %24, %cst_18 [1] : vector<8x128xf32> to vector<8xf32>
    %26 = vector.shape_cast %25 : vector<8xf32> to vector<8x1xf32>
    %27 = math.log %26 : vector<8x1xf32>
    %28 = vector.extract_strided_slice %19 {offsets = [0, 0], sizes = [8, 16], strides = [1, 1]} : vector<8x128xf32> to vector<8x16xf32>
    %c0_19 = arith.constant 0 : index
    %c0_20 = arith.constant 0 : index
    %29 = vector.load %arg9[%c0_19, %c0_20] : memref<8x16xf32, #tpu.memory_space<vmem>>, vector<8x16xf32>
    tpu.vector_store %arg9[%c0_19, %c0_20], %28 {strides = array<i32>} : memref<8x16xf32, #tpu.memory_space<vmem>>, vector<8x16xf32>,
    %30 = vector.extract_strided_slice %23 {offsets = [0, 0], sizes = [8, 16], strides = [1, 1]} : vector<8x128xf32> to vector<8x16xf32>
    %31 = vector.broadcast %27 : vector<8x1xf32> to vector<8x16xf32>
    %32 = arith.subf %30, %31 : vector<8x16xf32>
    %c0_21 = arith.constant 0 : index
    %c0_22 = arith.constant 0 : index
    %33 = vector.load %arg8[%c0_21, %c0_22] : memref<8x16xf32, #tpu.memory_space<vmem>>, vector<8x16xf32>
    tpu.vector_store %arg8[%c0_21, %c0_22], %32 {strides = array<i32>} : memref<8x16xf32, #tpu.memory_space<vmem>>, vector<8x16xf32>,
    return
  }
  func.func @transform_0(%arg0: i32) -> (i32, i32) {
    %c0_i32 = arith.constant 0 : i32
    %c0_i32_0 = arith.constant 0 : i32
    return %arg0, %c0_i32 : i32, i32
  }
  func.func @transform_1(%arg0: i32) -> (i32, i32) {
    %c0_i32 = arith.constant 0 : i32
    %c0_i32_0 = arith.constant 0 : i32
    %c0_i32_1 = arith.constant 0 : i32
    return %c0_i32, %c0_i32_0 : i32, i32
  }
  func.func @transform_2(%arg0: i32) -> (i32, i32) {
    %c0_i32 = arith.constant 0 : i32
    %c0_i32_0 = arith.constant 0 : i32
    %c0_i32_1 = arith.constant 0 : i32
    return %c0_i32, %c0_i32_0 : i32, i32
  }
  func.func @transform_3(%arg0: i32) -> (i32, i32) {
    %c0_i32 = arith.constant 0 : i32
    %c0_i32_0 = arith.constant 0 : i32
    %c0_i32_1 = arith.constant 0 : i32
    return %c0_i32, %c0_i32_0 : i32, i32
  }
  func.func @transform_4(%arg0: i32) -> (i32, i32) {
    %c0_i32 = arith.constant 0 : i32
    %c0_i32_0 = arith.constant 0 : i32
    %c0_i32_1 = arith.constant 0 : i32
    return %c0_i32, %c0_i32_0 : i32, i32
  }
  func.func @transform_5(%arg0: i32) -> (i32, i32) {
    %c0_i32 = arith.constant 0 : i32
    %c0_i32_0 = arith.constant 0 : i32
    %c0_i32_1 = arith.constant 0 : i32
    return %c0_i32, %c0_i32_0 : i32, i32
  }
  func.func @transform_6(%arg0: i32) -> (i32, i32) {
    %c0_i32 = arith.constant 0 : i32
    %c0_i32_0 = arith.constant 0 : i32
    %c0_i32_1 = arith.constant 0 : i32
    return %c0_i32, %c0_i32_0 : i32, i32
  }
  func.func @transform_7(%arg0: i32) -> (i32, i32) {
    %c0_i32 = arith.constant 0 : i32
    %c0_i32_0 = arith.constant 0 : i32
    return %arg0, %c0_i32 : i32, i32
  }
  func.func @transform_8(%arg0: i32) -> (i32, i32) {
    %c0_i32 = arith.constant 0 : i32
    %c0_i32_0 = arith.constant 0 : i32
    return %arg0, %c0_i32 : i32, i32
  }
}

</mosaic_0001>

<llo_original>
// kernel: tpu_custom_call.1
$region0: #{tpu_custom_call.1}
  #allocation0 [shape = 'u32[]', space=smem, size = 0x4, offset = 0x4, fixed_abs, tag = 'smem constant byte address 0x4 - core index']
  #allocation1 [shape = 'u32[144,128]{1,0:T(1,128)}', space=vmem, size = 0x12000, scoped, tag = 'internal scratch']
  %s0 = inlined_call_operand.hbm [shape: f32[8,32], index: 0, kind: input, shape index: {}]
  %s1 = inlined_call_operand.hbm [shape: f32[32,128], index: 1, kind: input, shape index: {}]
  %s2 = inlined_call_operand.vmem [shape: f32[1,128], index: 2, kind: input, shape index: {}]
  %s3 = inlined_call_operand.hbm [shape: f32[128,128], index: 3, kind: input, shape index: {}]
  %s4 = inlined_call_operand.vmem [shape: f32[1,128], index: 4, kind: input, shape index: {}]
  %s5 = inlined_call_operand.hbm [shape: f32[128,128], index: 5, kind: input, shape index: {}]
  %s6 = inlined_call_operand.vmem [shape: f32[1,128], index: 6, kind: input, shape index: {}]
  %s7 = inlined_call_operand.hbm [shape: f32[8,16], index: 7, kind: output, shape index: {0}]
  %s8 = inlined_call_operand.hbm [shape: f32[8,16], index: 8, kind: output, shape index: {1}]
  %9 = xla_tuple %s7, %s8
  %s10 = sld [smem:[#allocation0]]
  $region62: #{tpu_custom_call.1} parent=0
    _
  %s12 = ssub.s32 1, %s10
  %s13 = scalar_select 0, %s12, %s10
  $region1: #{tpu_custom_call.1} parent=0
    #allocation2 [shape = 'u8[4096]{0}', space=vmem, size = 0x1000, scoped, tag = 'input window, operand 0, single buffered']
    #allocation3 [shape = 's32[1]{0}', space=sflag, size = 0x4, scoped, tag = 'scoped memory for tpu_custom_call.1']
    #allocation4 [shape = 's32[1]{0}', space=sflag, size = 0x4, scoped, tag = 'scoped memory for tpu_custom_call.1']
    #allocation5 [shape = 'u8[16384]{0}', space=vmem, size = 0x4000, scoped, tag = 'input window, operand 1, single buffered']
    #allocation6 [shape = 's32[1]{0}', space=sflag, size = 0x4, scoped, tag = 'scoped memory for tpu_custom_call.1']
    #allocation7 [shape = 'u8[65536]{0}', space=vmem, size = 0x10000, scoped, tag = 'input window, operand 3, single buffered']
    #allocation8 [shape = 'u8[65536]{0}', space=vmem, size = 0x10000, scoped, tag = 'input window, operand 5, single buffered']
    #allocation9 [shape = 's32[1]{0}', space=sflag, size = 0x4, scoped, tag = 'scoped memory for tpu_custom_call.1']
    #allocation10 [shape = 'u8[4096]{0}', space=vmem, size = 0x1000, scoped, tag = 'output window, operand 0, single buffered']
    #allocation11 [shape = 'u8[4096]{0}', space=vmem, size = 0x1000, scoped, tag = 'output window, operand 1, single buffered']
    #allocation12 [shape = 's32[1]{0}', space=sflag, size = 0x4, scoped, tag = 'scoped memory for tpu_custom_call.1']
    %14 = vsyncpa [#allocation3], 0
    %15 = vsyncpa [#allocation6], 0
    %16 = vsyncpa [#allocation9], 0
    %17 = vsyncpa [#allocation4], 0
    %18 = vsyncpa [#allocation12], 0
    // Predicated region
    $region2: #{tpu_custom_call.1} parent=1 // pred_check
      _
    $region3: #{tpu_custom_call.1} parent=1 // pred_check_branch
      %20 = sbr.rel (0) target = $region5
    $region4: #{tpu_custom_call.1} parent=1 // pred_region
      %s22 = ssub.s32 128, 128
      %23 = vsyncadd [#allocation3], %s22
      %s25 = sshll.u32 [#allocation2], 4
      %s26 = int_to_ptr.vmem [resolvable:$true] %s25
      %28 = dma.hbm_to_vmem [thread:$0]  %s0, 128, %s26, [#allocation3]
    $region5: #{tpu_custom_call.1} parent=1 // pred_fallthru
      _
    // Predicated region
    $region6: #{tpu_custom_call.1} parent=1 // pred_check
      _
    $region7: #{tpu_custom_call.1} parent=1 // pred_check_branch
      %30 = sbr.rel (0) target = $region9
    $region8: #{tpu_custom_call.1} parent=1 // pred_region
      %s32 = ssub.s32 512, 512
      %33 = vsyncadd [#allocation6], %s32
      %s34 = sshll.u32 [#allocation5], 4
      %s35 = int_to_ptr.vmem [resolvable:$true] %s34
      %40 = dma.hbm_to_vmem [thread:$0]  %s1, 512, %s35, [#allocation6], 128, 128, 8
    $region9: #{tpu_custom_call.1} parent=1 // pred_fallthru
      _
    // Predicated region
    $region10: #{tpu_custom_call.1} parent=1 // pred_check
      _
    $region11: #{tpu_custom_call.1} parent=1 // pred_check_branch
      %42 = sbr.rel (0) target = $region13
    $region12: #{tpu_custom_call.1} parent=1 // pred_region
      _
    $region13: #{tpu_custom_call.1} parent=1 // pred_fallthru
      _
    // Predicated region
    $region14: #{tpu_custom_call.1} parent=1 // pred_check
      _
    $region15: #{tpu_custom_call.1} parent=1 // pred_check_branch
      %44 = sbr.rel (0) target = $region17
    $region16: #{tpu_custom_call.1} parent=1 // pred_region
      %s46 = ssub.s32 2048, 2048
      %47 = vsyncadd [#allocation6], %s46
      %s48 = sshll.u32 [#allocation7], 4
      %s49 = int_to_ptr.vmem [resolvable:$true] %s48
      %54 = dma.hbm_to_vmem [thread:$0]  %s3, 2048, %s49, [#allocation6], 128, 128, 8
    $region17: #{tpu_custom_call.1} parent=1 // pred_fallthru
      _
    // Predicated region
    $region18: #{tpu_custom_call.1} parent=1 // pred_check
      _
    $region19: #{tpu_custom_call.1} parent=1 // pred_check_branch
      %56 = sbr.rel (0) target = $region21
    $region20: #{tpu_custom_call.1} parent=1 // pred_region
      _
    $region21: #{tpu_custom_call.1} parent=1 // pred_fallthru
      _
    // Predicated region
    $region22: #{tpu_custom_call.1} parent=1 // pred_check
      _
    $region23: #{tpu_custom_call.1} parent=1 // pred_check_branch
      %58 = sbr.rel (0) target = $region25
    $region24: #{tpu_custom_call.1} parent=1 // pred_region
      %s60 = ssub.s32 2048, 2048
      %61 = vsyncadd [#allocation9], %s60
      %s62 = sshll.u32 [#allocation8], 4
      %s63 = int_to_ptr.vmem [resolvable:$true] %s62
      %68 = dma.hbm_to_vmem [thread:$0]  %s5, 2048, %s63, [#allocation9], 128, 128, 8
    $region25: #{tpu_custom_call.1} parent=1 // pred_fallthru
      _
    // Predicated region
    $region26: #{tpu_custom_call.1} parent=1 // pred_check
      _
    $region27: #{tpu_custom_call.1} parent=1 // pred_check_branch
      %70 = sbr.rel (0) target = $region29
    $region28: #{tpu_custom_call.1} parent=1 // pred_region
      _
    $region29: #{tpu_custom_call.1} parent=1 // pred_fallthru
      _
    // Predicated region
    $region30: #{tpu_custom_call.1} parent=1 // pred_check
      _
    $region31: #{tpu_custom_call.1} parent=1 // pred_check_branch
      %72 = sbr.rel (0) target = $region33
    $region32: #{tpu_custom_call.1} parent=1 // pred_region
      %73 = dma.done [#allocation3], 128
    $region33: #{tpu_custom_call.1} parent=1 // pred_fallthru
      _
    // Predicated region
    $region34: #{tpu_custom_call.1} parent=1 // pred_check
      _
    $region35: #{tpu_custom_call.1} parent=1 // pred_check_branch
      %75 = sbr.rel (0) target = $region37
    $region36: #{tpu_custom_call.1} parent=1 // pred_region
      %76 = dma.done [#allocation6], 512
    $region37: #{tpu_custom_call.1} parent=1 // pred_fallthru
      _
    // Predicated region
    $region38: #{tpu_custom_call.1} parent=1 // pred_check
      _
    $region39: #{tpu_custom_call.1} parent=1 // pred_check_branch
      %78 = sbr.rel (0) target = $region41
    $region40: #{tpu_custom_call.1} parent=1 // pred_region
      %79 = dma.done [#allocation6], 2048
    $region41: #{tpu_custom_call.1} parent=1 // pred_fallthru
      _
    // Predicated region
    $region42: #{tpu_custom_call.1} parent=1 // pred_check
      _
    $region43: #{tpu_custom_call.1} parent=1 // pred_check_branch
      %81 = sbr.rel (0) target = $region45
    $region44: #{tpu_custom_call.1} parent=1 // pred_region
      %82 = dma.done [#allocation9], 2048
    $region45: #{tpu_custom_call.1} parent=1 // pred_fallthru
      _
    %v83 = vld [vmem:[#allocation2] sm:$0xff]
    %v84 = vld [vmem:[#allocation5] sm:$0xff]
    %v85 = vld [vmem:[#allocation5 + $0x8] sm:$0xff]
    %v86 = vld [vmem:[#allocation5 + $0x10] sm:$0xff]
    %v87 = vld [vmem:[#allocation5 + $0x18] sm:$0xff]
    %v88 = vld [vmem:[%s2] sm:$0x1]
    %v90 = vlaneseq
    %v91 = vshrl.u32 %v90, 7
    %v92 = vsub.s32 0, %v91
    %v93 = vrot.slane %v88, %v92
    %vm95 = vcmask 261120
    %v97 = vsel %vm95, %v83, 0
    %99 = vmatprep.subr.mxu0 0.0
    %100 = vmatpush1.msra.mxu0 %v84
    %101 = vmatprep.subr.mxu0 0.0
    %102 = vmatpush1.msra.mxu0 %v85
    %103 = vmatprep.subr.mxu0 0.0
    %104 = vmatpush1.msra.mxu0 %v86
    %105 = vmatprep.subr.mxu0 0.0
    %106 = vmatpush1.msra.mxu0 %v87
    %107 = vmatprep.subr.mxu0 0.0
    %108 = vmatpush1.msra.mxu0 0.0
    %109 = vmatprep.subr.mxu0 0.0
    %110 = vmatpush1.msra.mxu0 0.0
    %111 = vmatprep.subr.mxu0 0.0
    %112 = vmatpush1.msra.mxu0 0.0
    %113 = vmatprep.subr.mxu0 0.0
    %114 = vmatpush1.msra.mxu0 0.0
    %115 = vmatprep.subr.mxu0 0.0
    %116 = vmatpush1.msra.mxu0 0.0
    %117 = vmatprep.subr.mxu0 0.0
    %118 = vmatpush1.msra.mxu0 0.0
    %119 = vmatprep.subr.mxu0 0.0
    %120 = vmatpush1.msra.mxu0 0.0
    %121 = vmatprep.subr.mxu0 0.0
    %122 = vmatpush1.msra.mxu0 0.0
    %123 = vmatprep.subr.mxu0 0.0
    %124 = vmatpush1.msra.mxu0 0.0
    %125 = vmatprep.subr.mxu0 0.0
    %126 = vmatpush1.msra.mxu0 0.0
    %127 = vmatprep.subr.mxu0 0.0
    %128 = vmatpush1.msra.mxu0 0.0
    %129 = vmatprep.subr.mxu0 0.0
    %130 = vmatpush1.msra.mxu0 0.0
    %131 = vmatprep.subr.mxu0 0.0
    %132 = vmatpush1.msra.mxu0 0.0
    %133 = vmatprep.subr.mxu0 0.0
    %134 = vmatpush1.msra.mxu0 0.0
    %135 = vmatprep.subr.mxu0 0.0
    %136 = vmatpush1.msra.mxu0 0.0
    %137 = vmatprep.subr.mxu0 0.0
    %138 = vmatpush1.msra.mxu0 0.0
    %139 = vmatprep.subr.mxu0 0.0
    %140 = vmatpush1.msra.mxu0 0.0
    %141 = vmatprep.subr.mxu0 0.0
    %142 = vmatpush1.msra.mxu0 0.0
    %143 = vmatprep.subr.mxu0 0.0
    %144 = vmatpush1.msra.mxu0 0.0
    %145 = vmatprep.subr.mxu0 0.0
    %146 = vmatpush1.msra.mxu0 0.0
    %147 = vmatprep.subr.mxu0 0.0
    %148 = vmatpush1.msra.mxu0 0.0
    %149 = vmatprep.subr.mxu0 0.0
    %150 = vmatpush1.msra.mxu0 0.0
    %151 = vmatprep.subr.mxu0 0.0
    %152 = vmatpush1.msra.mxu0 0.0
    %153 = vmatprep.subr.mxu0 0.0
    %154 = vmatpush1.msra.mxu0 0.0
    %155 = vmatprep.subr.mxu0 0.0
    %156 = vmatpush1.msra.mxu0 0.0
    %157 = vmatprep.subr.mxu0 0.0
    %158 = vmatpush1.msra.mxu0 0.0
    %159 = vmatprep.subr.mxu0 0.0
    %160 = vmatpush1.msra.mxu0 0.0
    %161 = vmatprep.subr.mxu0 0.0
    %162 = vmatpush1.msra.mxu0 0.0
    %163 = vmatprep.mubr.f32.mxu0 0.0
    %164 = vmatmul.mubr.f32.gmra.mrb[0].mxu0 %v97
    %v165 = vpop.f32.mrb[0].mxu0
    %v166 = vadd.f32 %v93, %v165
    %v167 = vpop.f32.mrb[0].mxu0
    %168 = vdwg.mxu0
    %v169 = vmax.f32 %v166, 0.0
    %v170 = vld [vmem:[#allocation7] sm:$0xff]
    %v171 = vld [vmem:[#allocation7 + $0x8] sm:$0xff]
    %v172 = vld [vmem:[#allocation7 + $0x10] sm:$0xff]
    %v173 = vld [vmem:[#allocation7 + $0x18] sm:$0xff]
    %v174 = vld [vmem:[#allocation7 + $0x20] sm:$0xff]
    %v175 = vld [vmem:[#allocation7 + $0x28] sm:$0xff]
    %v176 = vld [vmem:[#allocation7 + $0x30] sm:$0xff]
    %v177 = vld [vmem:[#allocation7 + $0x38] sm:$0xff]
    %v178 = vld [vmem:[#allocation7 + $0x40] sm:$0xff]
    %v179 = vld [vmem:[#allocation7 + $0x48] sm:$0xff]
    %v180 = vld [vmem:[#allocation7 + $0x50] sm:$0xff]
    %v181 = vld [vmem:[#allocation7 + $0x58] sm:$0xff]
    %v182 = vld [vmem:[#allocation7 + $0x60] sm:$0xff]
    %v183 = vld [vmem:[#allocation7 + $0x68] sm:$0xff]
    %v184 = vld [vmem:[#allocation7 + $0x70] sm:$0xff]
    %v185 = vld [vmem:[#allocation7 + $0x78] sm:$0xff]
    %v186 = vld [vmem:[%s4] sm:$0x1]
    %v188 = vlaneseq
    %v189 = vshrl.u32 %v188, 7
    %v190 = vsub.s32 0, %v189
    %v191 = vrot.slane %v186, %v190
    %193 = vmatprep.subr.mxu0 0.0
    %194 = vmatpush1.msra.mxu0 %v170
    %195 = vmatprep.subr.mxu0 0.0
    %196 = vmatpush1.msra.mxu0 %v171
    %197 = vmatprep.subr.mxu0 0.0
    %198 = vmatpush1.msra.mxu0 %v172
    %199 = vmatprep.subr.mxu0 0.0
    %200 = vmatpush1.msra.mxu0 %v173
    %201 = vmatprep.subr.mxu0 0.0
    %202 = vmatpush1.msra.mxu0 %v174
    %203 = vmatprep.subr.mxu0 0.0
    %204 = vmatpush1.msra.mxu0 %v175
    %205 = vmatprep.subr.mxu0 0.0
    %206 = vmatpush1.msra.mxu0 %v176
    %207 = vmatprep.subr.mxu0 0.0
    %208 = vmatpush1.msra.mxu0 %v177
    %209 = vmatprep.subr.mxu0 0.0
    %210 = vmatpush1.msra.mxu0 %v178
    %211 = vmatprep.subr.mxu0 0.0
    %212 = vmatpush1.msra.mxu0 %v179
    %213 = vmatprep.subr.mxu0 0.0
    %214 = vmatpush1.msra.mxu0 %v180
    %215 = vmatprep.subr.mxu0 0.0
    %216 = vmatpush1.msra.mxu0 %v181
    %217 = vmatprep.subr.mxu0 0.0
    %218 = vmatpush1.msra.mxu0 %v182
    %219 = vmatprep.subr.mxu0 0.0
    %220 = vmatpush1.msra.mxu0 %v183
    %221 = vmatprep.subr.mxu0 0.0
    %222 = vmatpush1.msra.mxu0 %v184
    %223 = vmatprep.subr.mxu0 0.0
    %224 = vmatpush1.msra.mxu0 %v185
    %225 = vmatprep.subr.mxu0 0.0
    %226 = vmatpush1.msra.mxu0 0.0
    %227 = vmatprep.subr.mxu0 0.0
    %228 = vmatpush1.msra.mxu0 0.0
    %229 = vmatprep.subr.mxu0 0.0
    %230 = vmatpush1.msra.mxu0 0.0
    %231 = vmatprep.subr.mxu0 0.0
    %232 = vmatpush1.msra.mxu0 0.0
    %233 = vmatprep.subr.mxu0 0.0
    %234 = vmatpush1.msra.mxu0 0.0
    %235 = vmatprep.subr.mxu0 0.0
    %236 = vmatpush1.msra.mxu0 0.0
    %237 = vmatprep.subr.mxu0 0.0
    %238 = vmatpush1.msra.mxu0 0.0
    %239 = vmatprep.subr.mxu0 0.0
    %240 = vmatpush1.msra.mxu0 0.0
    %241 = vmatprep.subr.mxu0 0.0
    %242 = vmatpush1.msra.mxu0 0.0
    %243 = vmatprep.subr.mxu0 0.0
    %244 = vmatpush1.msra.mxu0 0.0
    %245 = vmatprep.subr.mxu0 0.0
    %246 = vmatpush1.msra.mxu0 0.0
    %247 = vmatprep.subr.mxu0 0.0
    %248 = vmatpush1.msra.mxu0 0.0
    %249 = vmatprep.subr.mxu0 0.0
    %250 = vmatpush1.msra.mxu0 0.0
    %251 = vmatprep.subr.mxu0 0.0
    %252 = vmatpush1.msra.mxu0 0.0
    %253 = vmatprep.subr.mxu0 0.0
    %254 = vmatpush1.msra.mxu0 0.0
    %255 = vmatprep.subr.mxu0 0.0
    %256 = vmatpush1.msra.mxu0 0.0
    %257 = vmatprep.mubr.f32.mxu0 0.0
    %258 = vmatmul.mubr.f32.gmra.mrb[0].mxu0 %v169
    %v259 = vpop.f32.mrb[0].mxu0
    %v260 = vadd.f32 %v191, %v259
    %v261 = vpop.f32.mrb[0].mxu0
    %262 = vdwg.mxu0
    %v263 = vmax.f32 %v260, 0.0
    %v264 = vld [vmem:[#allocation8] sm:$0xff]
    %v265 = vld [vmem:[#allocation8 + $0x8] sm:$0xff]
    %v266 = vld [vmem:[#allocation8 + $0x10] sm:$0xff]
    %v267 = vld [vmem:[#allocation8 + $0x18] sm:$0xff]
    %v268 = vld [vmem:[#allocation8 + $0x20] sm:$0xff]
    %v269 = vld [vmem:[#allocation8 + $0x28] sm:$0xff]
    %v270 = vld [vmem:[#allocation8 + $0x30] sm:$0xff]
    %v271 = vld [vmem:[#allocation8 + $0x38] sm:$0xff]
    %v272 = vld [vmem:[#allocation8 + $0x40] sm:$0xff]
    %v273 = vld [vmem:[#allocation8 + $0x48] sm:$0xff]
    %v274 = vld [vmem:[#allocation8 + $0x50] sm:$0xff]
    %v275 = vld [vmem:[#allocation8 + $0x58] sm:$0xff]
    %v276 = vld [vmem:[#allocation8 + $0x60] sm:$0xff]
    %v277 = vld [vmem:[#allocation8 + $0x68] sm:$0xff]
    %v278 = vld [vmem:[#allocation8 + $0x70] sm:$0xff]
    %v279 = vld [vmem:[#allocation8 + $0x78] sm:$0xff]
    %v280 = vld [vmem:[%s6] sm:$0x1]
    %v282 = vlaneseq
    %v283 = vshrl.u32 %v282, 7
    %v284 = vsub.s32 0, %v283
    %v285 = vrot.slane %v280, %v284
    %287 = vmatprep.subr.mxu0 0.0
    %288 = vmatpush1.msra.mxu0 %v264
    %289 = vmatprep.subr.mxu0 0.0
    %290 = vmatpush1.msra.mxu0 %v265
    %291 = vmatprep.subr.mxu0 0.0
    %292 = vmatpush1.msra.mxu0 %v266
    %293 = vmatprep.subr.mxu0 0.0
    %294 = vmatpush1.msra.mxu0 %v267
    %295 = vmatprep.subr.mxu0 0.0
    %296 = vmatpush1.msra.mxu0 %v268
    %297 = vmatprep.subr.mxu0 0.0
    %298 = vmatpush1.msra.mxu0 %v269
    %299 = vmatprep.subr.mxu0 0.0
    %300 = vmatpush1.msra.mxu0 %v270
    %301 = vmatprep.subr.mxu0 0.0
    %302 = vmatpush1.msra.mxu0 %v271
    %303 = vmatprep.subr.mxu0 0.0
    %304 = vmatpush1.msra.mxu0 %v272
    %305 = vmatprep.subr.mxu0 0.0
    %306 = vmatpush1.msra.mxu0 %v273
    %307 = vmatprep.subr.mxu0 0.0
    %308 = vmatpush1.msra.mxu0 %v274
    %309 = vmatprep.subr.mxu0 0.0
    %310 = vmatpush1.msra.mxu0 %v275
    %311 = vmatprep.subr.mxu0 0.0
    %312 = vmatpush1.msra.mxu0 %v276
    %313 = vmatprep.subr.mxu0 0.0
    %314 = vmatpush1.msra.mxu0 %v277
    %315 = vmatprep.subr.mxu0 0.0
    %316 = vmatpush1.msra.mxu0 %v278
    %317 = vmatprep.subr.mxu0 0.0
    %318 = vmatpush1.msra.mxu0 %v279
    %319 = vmatprep.subr.mxu0 0.0
    %320 = vmatpush1.msra.mxu0 0.0
    %321 = vmatprep.subr.mxu0 0.0
    %322 = vmatpush1.msra.mxu0 0.0
    %323 = vmatprep.subr.mxu0 0.0
    %324 = vmatpush1.msra.mxu0 0.0
    %325 = vmatprep.subr.mxu0 0.0
    %326 = vmatpush1.msra.mxu0 0.0
    %327 = vmatprep.subr.mxu0 0.0
    %328 = vmatpush1.msra.mxu0 0.0
    %329 = vmatprep.subr.mxu0 0.0
    %330 = vmatpush1.msra.mxu0 0.0
    %331 = vmatprep.subr.mxu0 0.0
    %332 = vmatpush1.msra.mxu0 0.0
    %333 = vmatprep.subr.mxu0 0.0
    %334 = vmatpush1.msra.mxu0 0.0
    %335 = vmatprep.subr.mxu0 0.0
    %336 = vmatpush1.msra.mxu0 0.0
    %337 = vmatprep.subr.mxu0 0.0
    %338 = vmatpush1.msra.mxu0 0.0
    %339 = vmatprep.subr.mxu0 0.0
    %340 = vmatpush1.msra.mxu0 0.0
    %341 = vmatprep.subr.mxu0 0.0
    %342 = vmatpush1.msra.mxu0 0.0
    %343 = vmatprep.subr.mxu0 0.0
    %344 = vmatpush1.msra.mxu0 0.0
    %345 = vmatprep.subr.mxu0 0.0
    %346 = vmatpush1.msra.mxu0 0.0
    %347 = vmatprep.subr.mxu0 0.0
    %348 = vmatpush1.msra.mxu0 0.0
    %349 = vmatprep.subr.mxu0 0.0
    %350 = vmatpush1.msra.mxu0 0.0
    %351 = vmatprep.mubr.f32.mxu0 0.0
    %352 = vmatmul.mubr.f32.gmra.mrb[0].mxu0 %v263
    %v353 = vpop.f32.mrb[0].mxu0
    %v354 = vadd.f32 %v285, %v353
    %v355 = vpop.f32.mrb[0].mxu0
    %356 = vdwg.mxu0
    %357 = vmax.xlane.f32.xlu0 %v354
    %v358 = vpop.xlane.xlu0 %357
    %v359 = vsub.f32 %v354, %v358
    %v360 = vmul.f32 %v359, 1.442695
    %v361 = vpow.pop %v360
    %362 = vadd.xlane.f32.xlu0 %v361
    %v363 = vpop.xlane.xlu0 %362
    %v364 = vlog2.pop %v363
    %v365 = vmul.f32 %v364, 0.6931472
    %vm366 = vcmask 130048
    %367 = vst.msk [vmem:[#allocation11] sm:$0xff] %vm366, %v354
    %v368 = vsub.f32 %v359, %v365
    %369 = vst.msk [vmem:[#allocation10] sm:$0xff] %vm366, %v368
    // Predicated region
    $region46: #{tpu_custom_call.1} parent=1 // pred_check
      _
    $region47: #{tpu_custom_call.1} parent=1 // pred_check_branch
      %371 = sbr.rel (0) target = $region49
    $region48: #{tpu_custom_call.1} parent=1 // pred_region
      %s373 = ssub.s32 128, 128
      %374 = vsyncadd [#allocation4], %s373
      %s376 = sshll.u32 [#allocation10], 4
      %s377 = int_to_ptr.vmem [resolvable:$true] %s376
      %379 = dma.vmem_to_hbm [thread:$0]  %s377, 128, %s7, [#allocation4]
    $region49: #{tpu_custom_call.1} parent=1 // pred_fallthru
      _
    // Predicated region
    $region50: #{tpu_custom_call.1} parent=1 // pred_check
      _
    $region51: #{tpu_custom_call.1} parent=1 // pred_check_branch
      %381 = sbr.rel (0) target = $region53
    $region52: #{tpu_custom_call.1} parent=1 // pred_region
      %s383 = ssub.s32 128, 128
      %384 = vsyncadd [#allocation12], %s383
      %s386 = sshll.u32 [#allocation11], 4
      %s387 = int_to_ptr.vmem [resolvable:$true] %s386
      %389 = dma.vmem_to_hbm [thread:$0]  %s387, 128, %s8, [#allocation12]
    $region53: #{tpu_custom_call.1} parent=1 // pred_fallthru
      _
    // Predicated region
    $region54: #{tpu_custom_call.1} parent=1 // pred_check
      _
    $region55: #{tpu_custom_call.1} parent=1 // pred_check_branch
      %391 = sbr.rel (0) target = $region57
    $region56: #{tpu_custom_call.1} parent=1 // pred_region
      %392 = dma.done [#allocation4], 128
    $region57: #{tpu_custom_call.1} parent=1 // pred_fallthru
      _
    // Predicated region
    $region58: #{tpu_custom_call.1} parent=1 // pred_check
      _
    $region59: #{tpu_custom_call.1} parent=1 // pred_check_branch
      %394 = sbr.rel (0) target = $region61
    $region60: #{tpu_custom_call.1} parent=1 // pred_region
      %395 = dma.done [#allocation12], 128
    $region61: #{tpu_custom_call.1} parent=1 // pred_fallthru
      _
    %396 = vsyncpa [#allocation3], 1
    %397 = vsyncpa [#allocation6], 1
    %398 = vsyncpa [#allocation9], 1
    %399 = vsyncpa [#allocation4], 1
    %400 = vsyncpa [#allocation12], 1

</llo_original>
